<compile_context>
chip_gen: v7x
topology: tpu7x:2x2x1
jax: 0.10.0
libtpu: 0.0.40
codegen_flags: <defaults>
</compile_context>

<pallas_src>
import functools
import math

import jax
import jax.numpy as jnp
from jax.experimental import pallas as pl
from jax.experimental.pallas import tpu as pltpu

EPS = 1e-5


# --------------------------------------------------------------------------
# pass 1: conv1 (3x3 / stride s) [+ fused 1x1 projection] + BN partials
# --------------------------------------------------------------------------
def conv1_kernel(xph_ref, w_ref, y1_ref, st_ref,
                 *, s, Ho, Wo, Hph, Cin, Cmid, use_proj):
    xv = xph_ref[0]                                    # (s*s*Hph, Wph, Cin) bf16

    # One sublane window per distinct column offset, shared by the taps.
    c0s = sorted({kw // s for kw in range(3)})
    colw = {c0: xv[:, c0:c0 + Wo, :] for c0 in c0s}

    # Fold the 9 taps onto the contraction axis entirely in-register.
    taps = []
    for kh in range(3):
        for kw in range(3):
            p = (kh % s) * s + (kw % s)                # space-to-depth phase
            r0, c0 = kh // s, kw // s
            taps.append(colw[c0][p * Hph + r0: p * Hph + r0 + Ho])
    patches = jnp.concatenate(taps, axis=-1).reshape(Ho * Wo, 9 * Cin)

    # Single MXU matmul; projection shortcut columns ride along for free.
    yall = jnp.dot(patches, w_ref[...], preferred_element_type=jnp.float32)
    y1 = yall[:, :Cmid]
    y1_ref[0] = y1.reshape(Ho, Wo, Cmid)

    m1 = jnp.mean(y1, axis=0, keepdims=True)
    v1 = jnp.sum((y1 - m1) ** 2, axis=0, keepdims=True)
    if use_proj:
        sc = yall[:, Cmid:2 * Cmid]                    # stats only, never stored
        ms = jnp.mean(sc, axis=0, keepdims=True)
        vs = jnp.sum((sc - ms) ** 2, axis=0, keepdims=True)
        st_ref[0] = jnp.concatenate([m1, v1, ms, vs], axis=0)
    else:
        st_ref[0] = jnp.concatenate([m1, v1], axis=0)


# --------------------------------------------------------------------------
# pass 2: folded bn1 + relu + conv2 (3x3 / 1) + BN partials
# --------------------------------------------------------------------------
def bn1_relu_conv2_kernel(y1_ref, s1_ref, b1_ref, w2_ref, y2_ref, st_ref,
                          *, Ho, Wo, Cmid):
    # BN is a single FMA with pre-folded scale/bias (f32 elementwise).
    y1 = jnp.maximum(y1_ref[0] * s1_ref[...] + b1_ref[...], 0.0)
    y1b = y1.astype(jnp.bfloat16)

    # Zero-pad in-register; boundaries handled by the pad, no masks needed.
    zr = jnp.zeros((1, Wo, Cmid), jnp.bfloat16)
    zc = jnp.zeros((Ho + 2, 1, Cmid), jnp.bfloat16)
    yp = jnp.concatenate([zr, y1b, zr], axis=0)
    yp = jnp.concatenate([zc, yp, zc], axis=1)         # (Ho+2, Wo+2, Cmid)

    cols = [yp[:, kw:kw + Wo, :] for kw in range(3)]   # 3 column windows
    taps = [cols[kw][kh:kh + Ho] for kh in range(3) for kw in range(3)]
    patches = jnp.concatenate(taps, axis=-1).reshape(Ho * Wo, 9 * Cmid)

    y2 = jnp.dot(patches, w2_ref[...], preferred_element_type=jnp.float32)
    y2_ref[0] = y2.reshape(Ho, Wo, Cmid)

    m = jnp.mean(y2, axis=0, keepdims=True)
    v = jnp.sum((y2 - m) ** 2, axis=0, keepdims=True)
    st_ref[0] = jnp.concatenate([m, v], axis=0)


# --------------------------------------------------------------------------
# pass 3: folded bn2 + shortcut (identity | 1x1 proj + folded bn) + add
# --------------------------------------------------------------------------
def bn2_add_kernel(y2_ref, xc_ref, s2_ref, b2_ref, ws_ref, ss_ref, bs_ref,
                   pre_ref, *, use_proj):
    y2 = y2_ref[...] * s2_ref[...] + b2_ref[...]
    if use_proj:
        sc = jnp.dot(xc_ref[...], ws_ref[...], preferred_element_type=jnp.float32)
        sc = sc * ss_ref[...] + bs_ref[...]
    else:
        sc = xc_ref[...]
    pre_ref[...] = y2 + sc                             # preact (relu in wrapper)


# --------------------------------------------------------------------------
# wrapper helpers
# --------------------------------------------------------------------------
def _fold_bn(mean_per, m2_per, count, gamma, beta):
    """Exact Chan merge of per-image (mean, M2) -> folded BN scale/bias."""
    n = mean_per.shape[0]
    gmean = jnp.mean(mean_per, axis=0, keepdims=True)
    gm2 = (jnp.sum(m2_per, axis=0, keepdims=True)
           + count * jnp.sum((mean_per - gmean) ** 2, axis=0, keepdims=True))
    gvar = gm2 / (n * count)
    scale = gamma * jax.lax.rsqrt(gvar + EPS)
    bias = beta - gmean * scale
    return scale.astype(jnp.float32), bias.astype(jnp.float32)


def _vmem_budget_bytes():
    try:
        cap = getattr(pltpu.get_tpu_info(), "vmem_capacity_bytes", 0) or 0
    except Exception:
        cap = 0
    if cap >= 64 * 1024 * 1024:
        return int(min(cap * 3 // 4, 96 * 1024 * 1024))
    return 32 * 1024 * 1024


def _row_tile(rows, cap=4096):
    if rows <= cap:
        return rows
    t = cap - cap % 8
    while t >= 8:
        if rows % t == 0:
            return t
        t -= 8
    return cap - cap % 8


# --------------------------------------------------------------------------
# full forward
# --------------------------------------------------------------------------
def basic_block_forward(x_nchw, params, stride):
    """BasicBlock.forward (is_last=True): returns (out, preact) in NCHW."""
    w1, w2, ws, g1, b1, g2, b2, gs, bs = params
    N, Cin, H, W = x_nchw.shape
    Cmid = w1.shape[-1]
    s = int(stride)
    use_proj = (s != 1) or (Cin != Cmid)
    Ho = (H - 1) // s + 1
    Wo = (W - 1) // s + 1
    HoWo = Ho * Wo
    Hph = 2 // s + Ho
    Wph = 2 // s + Wo
    count = float(HoWo)

    x = jnp.transpose(x_nchw, (0, 2, 3, 1)).astype(jnp.float32)   # NHWC

    # conv1 input: bf16, pad by 1, space-to-depth ("phase") layout (1x traffic)
    xb = x.astype(jnp.bfloat16)
    xp = jnp.pad(xb, ((0, 0), (1, 1), (1, 1), (0, 0)))
    xp = jnp.pad(xp, ((0, 0), (0, s * Hph - (H + 2)),
                      (0, s * Wph - (W + 2)), (0, 0)))
    x6 = xp.reshape(N, Hph, s, Wph, s, Cin)
    xph = jnp.transpose(x6, (0, 2, 4, 1, 3, 5)).reshape(N, s * s * Hph, Wph, Cin)

    # shortcut input (strided positions); never written back by a kernel
    xc = x[:, ::s, ::s, :].reshape(N * HoWo, Cin)
    if use_proj:
        xc = xc.astype(jnp.bfloat16)       # it only feeds the 1x1 matmul

    # weights: bf16 operands, fused [w1 | padded ws] for the projection case
    w1s = w1.reshape(9 * Cin, Cmid)
    if use_proj:
        ws_pad = jnp.zeros((9 * Cin, Cmid), jnp.float32)
        ws_pad = ws_pad.at[4 * Cin:5 * Cin, :].set(ws)   # center tap rows
        w1sc = jnp.concatenate([w1s, ws_pad], axis=1)
        outC = 2 * Cmid
    else:
        w1sc = w1s
        outC = Cmid
    w1sc = w1sc.astype(jnp.bfloat16)
    w2s = w2.reshape(9 * Cmid, Cmid).astype(jnp.bfloat16)
    ws_b = ws.astype(jnp.bfloat16)

    cparams = pltpu.CompilerParams(
        dimension_semantics=("parallel",),
        vmem_limit_bytes=_vmem_budget_bytes())

    nst1 = 4 if use_proj else 2

    # ---- pass 1: conv1 (+ fused projection) + per-image BN partials ----
    k1 = functools.partial(conv1_kernel, s=s, Ho=Ho, Wo=Wo, Hph=Hph,
                           Cin=Cin, Cmid=Cmid, use_proj=use_proj)
    y1raw, st1 = pl.pallas_call(
        k1,
        out_shape=(jax.ShapeDtypeStruct((N, Ho, Wo, Cmid), jnp.float32),
                   jax.ShapeDtypeStruct((N, nst1, Cmid), jnp.float32)),
        grid_spec=pltpu.PrefetchScalarGridSpec(
            num_scalar_prefetch=0, grid=(N,),
            in_specs=[pl.BlockSpec((1, s * s * Hph, Wph, Cin),
                                   lambda n: (n, 0, 0, 0)),
                      pl.BlockSpec((9 * Cin, outC), lambda n: (0, 0))],
            out_specs=[pl.BlockSpec((1, Ho, Wo, Cmid), lambda n: (n, 0, 0, 0)),
                       pl.BlockSpec((1, nst1, Cmid), lambda n: (n, 0, 0))]),
        compiler_params=cparams,
    )(xph, w1sc)

    # ---- fold BN scale/bias once (tiny XLA work between passes) ----
    scale1, bias1 = _fold_bn(st1[:, 0, :], st1[:, 1, :], count, g1, b1)
    if use_proj:
        scale_s, bias_s = _fold_bn(st1[:, 2, :], st1[:, 3, :], count, gs, bs)
    else:
        scale_s = jnp.zeros((1, Cmid), jnp.float32)
        bias_s = jnp.zeros((1, Cmid), jnp.float32)

    # ---- pass 2: folded bn1 + relu + conv2 + per-image BN partials ----
    k2 = functools.partial(bn1_relu_conv2_kernel, Ho=Ho, Wo=Wo, Cmid=Cmid)
    y2raw, st2 = pl.pallas_call(
        k2,
        out_shape=(jax.ShapeDtypeStruct((N, Ho, Wo, Cmid), jnp.float32),
                   jax.ShapeDtypeStruct((N, 2, Cmid), jnp.float32)),
        grid_spec=pltpu.PrefetchScalarGridSpec(
            num_scalar_prefetch=0, grid=(N,),
            in_specs=[pl.BlockSpec((1, Ho, Wo, Cmid), lambda n: (n, 0, 0, 0)),
                      pl.BlockSpec((1, Cmid), lambda n: (0, 0)),
                      pl.BlockSpec((1, Cmid), lambda n: (0, 0)),
                      pl.BlockSpec((9 * Cmid, Cmid), lambda n: (0, 0))],
            out_specs=[pl.BlockSpec((1, Ho, Wo, Cmid), lambda n: (n, 0, 0, 0)),
                       pl.BlockSpec((1, 2, Cmid), lambda n: (n, 0, 0))]),
        compiler_params=cparams,
    )(y1raw, scale1, bias1, w2s)

    scale2, bias2 = _fold_bn(st2[:, 0, :], st2[:, 1, :], count, g2, b2)

    # ---- pass 3: folded bn2 + shortcut + add, row-flattened & tiled ----
    R = N * HoWo
    TR = _row_tile(R)
    y2flat = y2raw.reshape(R, Cmid)

    k3 = functools.partial(bn2_add_kernel, use_proj=use_proj)
    preflat = pl.pallas_call(
        k3,
        out_shape=jax.ShapeDtypeStruct((R, Cmid), jnp.float32),
        grid_spec=pltpu.PrefetchScalarGridSpec(
            num_scalar_prefetch=0, grid=(pl.cdiv(R, TR),),
            in_specs=[pl.BlockSpec((TR, Cmid), lambda r: (r, 0)),
                      pl.BlockSpec((TR, Cin), lambda r: (r, 0)),
                      pl.BlockSpec((1, Cmid), lambda r: (0, 0)),
                      pl.BlockSpec((1, Cmid), lambda r: (0, 0)),
                      pl.BlockSpec((Cin, Cmid), lambda r: (0, 0)),
                      pl.BlockSpec((1, Cmid), lambda r: (0, 0)),
                      pl.BlockSpec((1, Cmid), lambda r: (0, 0))],
            out_specs=pl.BlockSpec((TR, Cmid), lambda r: (r, 0))),
        compiler_params=cparams,
    )(y2flat, xc, scale2, bias2, ws_b, scale_s, bias_s)

    preact = jnp.transpose(preflat.reshape(N, Ho, Wo, Cmid), (0, 3, 1, 2))
    out = jax.nn.relu(preact)              # out = relu(preact), outside kernels
    return out, preact


# --------------------------------------------------------------------------
# pure-JAX reference (training-mode BN; same bf16 matmul-operand precision)
# --------------------------------------------------------------------------
def ref_forward(x_nchw, params, stride):
    w1, w2, ws, g1, b1, g2, b2, gs, bs = params
    x = jnp.transpose(x_nchw, (0, 2, 3, 1)).astype(jnp.float32)

    def conv(z, w, s, pad):
        return jax.lax.conv_general_dilated(
            z.astype(jnp.bfloat16), w.astype(jnp.bfloat16), (s, s),
            [(pad, pad), (pad, pad)],
            dimension_numbers=('NHWC', 'HWIO', 'NHWC'),
            preferred_element_type=jnp.float32)

    def bn(z, g, b):
        mu = z.mean(axis=(0, 1, 2), keepdims=True)
        var = ((z - mu) ** 2).mean(axis=(0, 1, 2), keepdims=True)
        return (z - mu) * jax.lax.rsqrt(var + EPS) * g.reshape(1, 1, 1, -1) \
            + b.reshape(1, 1, 1, -1)

    o = jax.nn.relu(bn(conv(x, w1, stride, 1), g1, b1))
    o = bn(conv(o, w2, 1, 1), g2, b2)
    Cin, Cmid = ws.shape
    if stride != 1 or Cin != Cmid:
        sc = bn(conv(x, ws.reshape(1, 1, Cin, Cmid), stride, 0), gs, bs)
    else:
        sc = x
    pre = o + sc
    out = jax.nn.relu(pre)
    return jnp.transpose(out, (0, 3, 1, 2)), jnp.transpose(pre, (0, 3, 1, 2))


def make_params(key, cin, planes):
    k1, k2, k3, k4, k5 = jax.random.split(key, 5)
    w1 = jax.random.normal(k1, (3, 3, cin, planes), jnp.float32) / math.sqrt(9 * cin)
    w2 = jax.random.normal(k2, (3, 3, planes, planes), jnp.float32) / math.sqrt(9 * planes)
    ws = jax.random.normal(k3, (cin, planes), jnp.float32) / math.sqrt(cin)
    gg = 1.0 + 0.1 * jax.random.normal(k4, (3, planes), jnp.float32)
    bb = 0.1 * jax.random.normal(k5, (3, planes), jnp.float32)
    g1, g2, gs = gg[0:1], gg[1:2], gg[2:3]
    b1, b2, bs = bb[0:1], bb[1:2], bb[2:3]
    return (w1, w2, ws, g1, b1, g2, b2, gs, bs)


if __name__ == "__main__":
    key = jax.random.PRNGKey(0)

    # Config A: BasicBlock(in_planes=4, planes=8, stride=2) -> projection shortcut
    kx, kp, key = jax.random.split(key, 3)
    x = jax.random.normal(kx, (2, 4, 16, 16), jnp.float32)
    params = make_params(kp, 4, 8)
    out, pre = basic_block_forward(x, params, stride=2)
    out = jax.block_until_ready(out)
    pre = jax.block_until_ready(pre)
    out_r, pre_r = ref_forward(x, params, stride=2)
    assert out.shape == (2, 8, 8, 8) and pre.shape == (2, 8, 8, 8)
    assert jnp.allclose(out, out_r, atol=5e-3, rtol=5e-3), \
        float(jnp.max(jnp.abs(out - out_r)))
    assert jnp.allclose(pre, pre_r, atol=5e-3, rtol=5e-3), \
        float(jnp.max(jnp.abs(pre - pre_r)))

    # Config B: BasicBlock(in_planes=8, planes=8, stride=1) -> identity shortcut
    kx, kp = jax.random.split(key)
    x = jax.random.normal(kx, (2, 8, 16, 16), jnp.float32)
    params = make_params(kp, 8, 8)
    out, pre = basic_block_forward(x, params, stride=1)
    out = jax.block_until_ready(out)
    pre = jax.block_until_ready(pre)
    out_r, pre_r = ref_forward(x, params, stride=1)
    assert out.shape == (2, 8, 16, 16) and pre.shape == (2, 8, 16, 16)
    assert jnp.allclose(out, out_r, atol=5e-3, rtol=5e-3), \
        float(jnp.max(jnp.abs(out - out_r)))
    assert jnp.allclose(pre, pre_r, atol=5e-3, rtol=5e-3), \
        float(jnp.max(jnp.abs(pre - pre_r)))

    print("KERNEL_OK")
</pallas_src>

<mosaic_0001>
module attributes {stable_mosaic.version = 11 : i64} {
  func.func @conv1_kernel(%arg0: i32, %arg1: memref<1x36x9x4xbf16, #tpu.memory_space<vmem>>, %arg2: memref<36x16xbf16, #tpu.memory_space<vmem>>, %arg3: memref<1x8x8x8xf32, #tpu.memory_space<vmem>>, %arg4: memref<1x4x8xf32, #tpu.memory_space<vmem>>) attributes {dimension_semantics = [#tpu.dimension_semantics<parallel>], iteration_bounds = array<i64: 2>, scalar_prefetch = 0 : i64, scratch_operands = 0 : i64, tpu.core_type = #tpu.core_type<tc>, window_params = [{transform_indices = @transform_0, window_bounds = array<i64: 1, 36, 9, 4>}, {pipeline_mode = #tpu.pipeline_mode<synchronous>, transform_indices = @transform_1, window_bounds = array<i64: 36, 16>}, {transform_indices = @transform_2, window_bounds = array<i64: 1, 8, 8, 8>}, {transform_indices = @transform_3, window_bounds = array<i64: 1, 4, 8>}]} {
    %c0 = arith.constant 0 : index
    %c0_0 = arith.constant 0 : index
    %c0_1 = arith.constant 0 : index
    %c0_2 = arith.constant 0 : index
    %0 = vector.load %arg1[%c0, %c0_0, %c0_1, %c0_2] : memref<1x36x9x4xbf16, #tpu.memory_space<vmem>>, vector<1x36x9x4xbf16>
    %1 = vector.shape_cast %0 : vector<1x36x9x4xbf16> to vector<36x9x4xbf16>
    %2 = vector.extract_strided_slice %1 {offsets = [0, 0, 0], sizes = [36, 8, 4], strides = [1, 1, 1]} : vector<36x9x4xbf16> to vector<36x8x4xbf16>
    %3 = vector.extract_strided_slice %1 {offsets = [0, 1, 0], sizes = [36, 8, 4], strides = [1, 1, 1]} : vector<36x9x4xbf16> to vector<36x8x4xbf16>
    %4 = vector.extract_strided_slice %2 {offsets = [0, 0, 0], sizes = [8, 8, 4], strides = [1, 1, 1]} : vector<36x8x4xbf16> to vector<8x8x4xbf16>
    %5 = vector.extract_strided_slice %2 {offsets = [9, 0, 0], sizes = [8, 8, 4], strides = [1, 1, 1]} : vector<36x8x4xbf16> to vector<8x8x4xbf16>
    %6 = vector.extract_strided_slice %3 {offsets = [0, 0, 0], sizes = [8, 8, 4], strides = [1, 1, 1]} : vector<36x8x4xbf16> to vector<8x8x4xbf16>
    %7 = vector.extract_strided_slice %2 {offsets = [18, 0, 0], sizes = [8, 8, 4], strides = [1, 1, 1]} : vector<36x8x4xbf16> to vector<8x8x4xbf16>
    %8 = vector.extract_strided_slice %2 {offsets = [27, 0, 0], sizes = [8, 8, 4], strides = [1, 1, 1]} : vector<36x8x4xbf16> to vector<8x8x4xbf16>
    %9 = vector.extract_strided_slice %3 {offsets = [18, 0, 0], sizes = [8, 8, 4], strides = [1, 1, 1]} : vector<36x8x4xbf16> to vector<8x8x4xbf16>
    %10 = vector.extract_strided_slice %2 {offsets = [1, 0, 0], sizes = [8, 8, 4], strides = [1, 1, 1]} : vector<36x8x4xbf16> to vector<8x8x4xbf16>
    %11 = vector.extract_strided_slice %2 {offsets = [10, 0, 0], sizes = [8, 8, 4], strides = [1, 1, 1]} : vector<36x8x4xbf16> to vector<8x8x4xbf16>
    %12 = vector.extract_strided_slice %3 {offsets = [1, 0, 0], sizes = [8, 8, 4], strides = [1, 1, 1]} : vector<36x8x4xbf16> to vector<8x8x4xbf16>
    %13 = tpu.concatenate %4, %5, %6, %7, %8, %9, %10, %11, %12 in 2 : vector<8x8x4xbf16>, vector<8x8x4xbf16>, vector<8x8x4xbf16>, vector<8x8x4xbf16>, vector<8x8x4xbf16>, vector<8x8x4xbf16>, vector<8x8x4xbf16>, vector<8x8x4xbf16>, vector<8x8x4xbf16> -> vector<8x8x36xbf16>
    %14 = vector.shape_cast %13 : vector<8x8x36xbf16> to vector<64x36xbf16>
    %c0_3 = arith.constant 0 : index
    %c0_4 = arith.constant 0 : index
    %15 = vector.load %arg2[%c0_3, %c0_4] : memref<36x16xbf16, #tpu.memory_space<vmem>>, vector<36x16xbf16>
    %cst = arith.constant dense<0.000000e+00> : vector<64x16xf32>
    %16 = tpu.matmul %14, %15, %cst {dimension_numbers = #tpu.dot_dimension_numbers<[1], [0], [0], [1], [0, 0, 1, 1], [], []>} : vector<64x36xbf16>, vector<36x16xbf16>, vector<64x16xf32> -> vector<64x16xf32>
    %17 = vector.extract_strided_slice %16 {offsets = [0, 0], sizes = [64, 8], strides = [1, 1]} : vector<64x16xf32> to vector<64x8xf32>
    %18 = vector.shape_cast %17 : vector<64x8xf32> to vector<8x8x8xf32>
    %c0_5 = arith.constant 0 : index
    %c0_6 = arith.constant 0 : index
    %c0_7 = arith.constant 0 : index
    %c0_8 = arith.constant 0 : index
    %19 = vector.load %arg3[%c0_5, %c0_6, %c0_7, %c0_8] : memref<1x8x8x8xf32, #tpu.memory_space<vmem>>, vector<1x8x8x8xf32>
    %20 = vector.shape_cast %19 : vector<1x8x8x8xf32> to vector<8x8x8xf32>
    %21 = vector.shape_cast %18 : vector<8x8x8xf32> to vector<1x8x8x8xf32>
    tpu.vector_store %arg3[%c0_5, %c0_6, %c0_7, %c0_8], %21 {strides = array<i32>} : memref<1x8x8x8xf32, #tpu.memory_space<vmem>>, vector<1x8x8x8xf32>,
    %cst_9 = arith.constant dense<0.000000e+00> : vector<8xf32>
    %22 = vector.multi_reduction <add>, %17, %cst_9 [0] : vector<64x8xf32> to vector<8xf32>
    %23 = vector.shape_cast %22 : vector<8xf32> to vector<1x8xf32>
    %cst_10 = arith.constant 6.400000e+01 : f32
    %24 = vector.broadcast %cst_10 : f32 to vector<1x8xf32>
    %25 = arith.divf %23, %24 : vector<1x8xf32>
    %26 = vector.broadcast %25 : vector<1x8xf32> to vector<64x8xf32>
    %27 = arith.subf %17, %26 : vector<64x8xf32>
    %28 = arith.mulf %27, %27 : vector<64x8xf32>
    %cst_11 = arith.constant dense<0.000000e+00> : vector<8xf32>
    %29 = vector.multi_reduction <add>, %28, %cst_11 [0] : vector<64x8xf32> to vector<8xf32>
    %30 = vector.shape_cast %29 : vector<8xf32> to vector<1x8xf32>
    %31 = vector.extract_strided_slice %16 {offsets = [0, 8], sizes = [64, 8], strides = [1, 1]} : vector<64x16xf32> to vector<64x8xf32>
    %cst_12 = arith.constant dense<0.000000e+00> : vector<8xf32>
    %32 = vector.multi_reduction <add>, %31, %cst_12 [0] : vector<64x8xf32> to vector<8xf32>
    %33 = vector.shape_cast %32 : vector<8xf32> to vector<1x8xf32>
    %cst_13 = arith.constant 6.400000e+01 : f32
    %34 = vector.broadcast %cst_13 : f32 to vector<1x8xf32>
    %35 = arith.divf %33, %34 : vector<1x8xf32>
    %36 = vector.broadcast %35 : vector<1x8xf32> to vector<64x8xf32>
    %37 = arith.subf %31, %36 : vector<64x8xf32>
    %38 = arith.mulf %37, %37 : vector<64x8xf32>
    %cst_14 = arith.constant dense<0.000000e+00> : vector<8xf32>
    %39 = vector.multi_reduction <add>, %38, %cst_14 [0] : vector<64x8xf32> to vector<8xf32>
    %40 = vector.shape_cast %39 : vector<8xf32> to vector<1x8xf32>
    %41 = tpu.concatenate %25, %30, %35, %40 in 0 : vector<1x8xf32>, vector<1x8xf32>, vector<1x8xf32>, vector<1x8xf32> -> vector<4x8xf32>
    %c0_15 = arith.constant 0 : index
    %c0_16 = arith.constant 0 : index
    %c0_17 = arith.constant 0 : index
    %42 = vector.load %arg4[%c0_15, %c0_16, %c0_17] : memref<1x4x8xf32, #tpu.memory_space<vmem>>, vector<1x4x8xf32>
    %43 = vector.shape_cast %42 : vector<1x4x8xf32> to vector<4x8xf32>
    %44 = vector.shape_cast %41 : vector<4x8xf32> to vector<1x4x8xf32>
    tpu.vector_store %arg4[%c0_15, %c0_16, %c0_17], %44 {strides = array<i32>} : memref<1x4x8xf32, #tpu.memory_space<vmem>>, vector<1x4x8xf32>,
    return
  }
  func.func @transform_0(%arg0: i32) -> (i32, i32, i32, i32) {
    %c0_i32 = arith.constant 0 : i32
    %c0_i32_0 = arith.constant 0 : i32
    %c0_i32_1 = arith.constant 0 : i32
    %c0_i32_2 = arith.constant 0 : i32
    return %arg0, %c0_i32, %c0_i32_0, %c0_i32_1 : i32, i32, i32, i32
  }
  func.func @transform_1(%arg0: i32) -> (i32, i32) {
    %c0_i32 = arith.constant 0 : i32
    %c0_i32_0 = arith.constant 0 : i32
    %c0_i32_1 = arith.constant 0 : i32
    return %c0_i32, %c0_i32_0 : i32, i32
  }
  func.func @transform_2(%arg0: i32) -> (i32, i32, i32, i32) {
    %c0_i32 = arith.constant 0 : i32
    %c0_i32_0 = arith.constant 0 : i32
    %c0_i32_1 = arith.constant 0 : i32
    %c0_i32_2 = arith.constant 0 : i32
    return %arg0, %c0_i32, %c0_i32_0, %c0_i32_1 : i32, i32, i32, i32
  }
  func.func @transform_3(%arg0: i32) -> (i32, i32, i32) {
    %c0_i32 = arith.constant 0 : i32
    %c0_i32_0 = arith.constant 0 : i32
    %c0_i32_1 = arith.constant 0 : i32
    return %arg0, %c0_i32, %c0_i32_0 : i32, i32, i32
  }
}

</mosaic_0001>

<llo_original>
// kernel: tpu_custom_call.1
$region0: #{tpu_custom_call.1}
  #allocation0 [shape = 'u32[]', space=smem, size = 0x4, offset = 0x4, fixed_abs, tag = 'smem constant byte address 0x4 - core index']
  #allocation1 [shape = 'u32[144,128]{1,0:T(1,128)}', space=vmem, size = 0x12000, scoped, tag = 'internal scratch']
  %s0 = inlined_call_operand.vmem [shape: bf16[2,36,9,4], index: 0, kind: input, shape index: {}]
  %s1 = inlined_call_operand.vmem [shape: bf16[36,16], index: 1, kind: input, shape index: {}]
  %s2 = inlined_call_operand.hbm [shape: f32[2,8,8,8], index: 2, kind: output, shape index: {0}]
  %s3 = inlined_call_operand.hbm [shape: f32[2,4,8], index: 3, kind: output, shape index: {1}]
  %4 = xla_tuple %s2, %s3
  %s5 = sld [smem:[#allocation0]]
  $region49: #{tpu_custom_call.1} parent=0
    _
  %s7 = ssub.s32 1, %s5
  %s8 = scalar_select 0, %s7, %s5
  $region1: #{tpu_custom_call.1} parent=0
    #allocation2 [shape = 'u8[65536]{0}', space=vmem, size = 0x10000, scoped, tag = 'output window, operand 0']
    #allocation3 [shape = 's32[2]{0}', space=sflag, size = 0x8, scoped, tag = 'scoped memory for tpu_custom_call.1']
    #allocation4 [shape = 'u8[4096]{0}', space=vmem, size = 0x1000, scoped, tag = 'output window, operand 1']
    #allocation5 [shape = 's32[2]{0}', space=sflag, size = 0x8, scoped, tag = 'scoped memory for tpu_custom_call.1']
    %9 = vsyncpa [#allocation3], 0
    %s10 = scalar_lea.sflag [#allocation3], 1
    %11 = vsyncpa %s10, 0
    %12 = vsyncpa [#allocation5], 0
    %s13 = scalar_lea.sflag [#allocation5], 1
    %14 = vsyncpa %s13, 0
    loop: start=0, step=1, limit=4
    $region2: #{tpu_custom_call.1} parent=1 // loop_pre_header
      _
    $region3: #{tpu_custom_call.1} parent=1 // loop_header
      %s16 = sphi 0, %s20
      %p17 = scmp.ge.s32.totalorder %s16, 4
      %s26 = sphi 0, %s28
      %s29 = sphi 0, %s26
      %s30 = sphi 0, %s29
      %s46 = sphi 0, %s30
      %s50 = sphi 0, %s50
      %s52 = sphi 0, %s50
      %s53 = sphi 0, %s52
      %s67 = sphi 0, %s53
      %s73 = sphi 0, %s75
      %s76 = sphi 0, %s73
      %s77 = sphi 0, %s76
      %s93 = sphi 0, %s77
      %s99 = sphi 0, %s101
      %s102 = sphi 0, %s99
      %s103 = sphi 0, %s102
      %s119 = sphi 0, %s103
    $region4: #{tpu_custom_call.1} parent=1 // loop_header_branch
      %19 = sbr.rel (%p17) target = $region8
    $region5: #{tpu_custom_call.1} parent=1 // loop_body
      %s21 = ssub.s32 %s16, 1
      %s22 = ssub.s32 %s16, 2
      %s23 = sadd.s32 %s16, 1
      %s24 = ssub.s32 %s16, %s23
      %p25 = scmp.eq.s32.totalorder %s24, 0
      %s27 = sadd.s32 %s26, 1
      %s28 = scalar_select %p25, %s26, %s27
      %p31 = pneg %p25
      %p32 = scmp.eq.s32.totalorder %s16, 1
      %p33 = por %p31, %p32
      %p34 = scmp.ne.s32.totalorder %s26, %s29
      %p35 = scmp.eq.s32.totalorder %s16, 0
      %p36 = por %p34, %p35
      %p37 = scmp.ne.s32.totalorder %s26, %s29
      %p38 = scmp.eq.s32.totalorder %s21, 1
      %p39 = por %p37, %p38
      %p40 = scmp.ne.s32.totalorder %s29, %s30
      %p41 = scmp.eq.s32.totalorder %s21, 0
      %p42 = por %p40, %p41
      %p43 = scmp.ne.s32.totalorder %s29, %s30
      %p44 = scmp.eq.s32.totalorder %s22, 1
      %p45 = por %p43, %p44
      %p47 = scmp.ne.s32.totalorder %s30, %s46
      %p48 = scmp.eq.s32.totalorder %s22, 0
      %p49 = por %p47, %p48
      %s51 = sadd.s32 %s50, 1
      %p54 = scmp.eq.s32.totalorder %s16, 1
      %p55 = scmp.ne.s32.totalorder %s50, %s52
      %p56 = scmp.eq.s32.totalorder %s16, 0
      %p57 = por %p55, %p56
      %p58 = scmp.ne.s32.totalorder %s50, %s52
      %p59 = scmp.eq.s32.totalorder %s21, 1
      %p60 = por %p58, %p59
      %p61 = scmp.ne.s32.totalorder %s52, %s53
      %p62 = scmp.eq.s32.totalorder %s21, 0
      %p63 = por %p61, %p62
      %p64 = scmp.ne.s32.totalorder %s52, %s53
      %p65 = scmp.eq.s32.totalorder %s22, 1
      %p66 = por %p64, %p65
      %p68 = scmp.ne.s32.totalorder %s53, %s67
      %p69 = scmp.eq.s32.totalorder %s22, 0
      %p70 = por %p68, %p69
      %s71 = ssub.s32 %s16, %s23
      %p72 = scmp.eq.s32.totalorder %s71, 0
      %s74 = sadd.s32 %s73, 1
      %s75 = scalar_select %p72, %s73, %s74
      %p78 = pneg %p72
      %p79 = scmp.eq.s32.totalorder %s16, 1
      %p80 = por %p78, %p79
      %p81 = scmp.ne.s32.totalorder %s73, %s76
      %p82 = scmp.eq.s32.totalorder %s16, 0
      %p83 = por %p81, %p82
      %p84 = scmp.ne.s32.totalorder %s73, %s76
      %p85 = scmp.eq.s32.totalorder %s21, 1
      %p86 = por %p84, %p85
      %p87 = scmp.ne.s32.totalorder %s76, %s77
      %p88 = scmp.eq.s32.totalorder %s21, 0
      %p89 = por %p87, %p88
      %p90 = scmp.ne.s32.totalorder %s76, %s77
      %p91 = scmp.eq.s32.totalorder %s22, 1
      %p92 = por %p90, %p91
      %p94 = scmp.ne.s32.totalorder %s77, %s93
      %p95 = scmp.eq.s32.totalorder %s22, 0
      %p96 = por %p94, %p95
      %s97 = ssub.s32 %s16, %s23
      %p98 = scmp.eq.s32.totalorder %s97, 0
      %s100 = sadd.s32 %s99, 1
      %s101 = scalar_select %p98, %s99, %s100
      %p104 = pneg %p98
      %p105 = scmp.eq.s32.totalorder %s16, 1
      %p106 = por %p104, %p105
      %p107 = scmp.ne.s32.totalorder %s99, %s102
      %p108 = scmp.eq.s32.totalorder %s16, 0
      %p109 = por %p107, %p108
      %p110 = scmp.ne.s32.totalorder %s99, %s102
      %p111 = scmp.eq.s32.totalorder %s21, 1
      %p112 = por %p110, %p111
      %p113 = scmp.ne.s32.totalorder %s102, %s103
      %p114 = scmp.eq.s32.totalorder %s21, 0
      %p115 = por %p113, %p114
      %p116 = scmp.ne.s32.totalorder %s102, %s103
      %p117 = scmp.eq.s32.totalorder %s22, 1
      %p118 = por %p116, %p117
      %p120 = scmp.ne.s32.totalorder %s103, %s119
      %p121 = scmp.eq.s32.totalorder %s22, 0
      %p122 = por %p120, %p121
      %p123 = scmp.le.s32.totalorder 1, %s16
      %p124 = scmp.lt.s32.totalorder %s16, 3
      %p125 = pnand %p123, %p124
      %p126 = pneg %p125
      // Predicated region
      $region9: #{tpu_custom_call.1} parent=5 // pred_check
        _
      $region10: #{tpu_custom_call.1} parent=5 // pred_check_branch
        %128 = sbr.rel (%p125) target = $region12
      $region11: #{tpu_custom_call.1} parent=5 // pred_region
        %s129 = ssub.s32 %s16, 1
        // Predicated region
        $region13: #{tpu_custom_call.1} parent=11 // pred_check
          %p130 = pneg %p63
        $region14: #{tpu_custom_call.1} parent=11 // pred_check_branch
          %132 = sbr.rel (%p130) target = $region16
        $region15: #{tpu_custom_call.1} parent=11 // pred_region
          _
        $region16: #{tpu_custom_call.1} parent=11 // pred_fallthru
          _
      $region12: #{tpu_custom_call.1} parent=5 // pred_fallthru
        _
      %p133 = scmp.lt.s32.totalorder %s16, 2
      // Predicated region
      $region17: #{tpu_custom_call.1} parent=5 // pred_check
        %p134 = pneg %p133
      $region18: #{tpu_custom_call.1} parent=5 // pred_check_branch
        %136 = sbr.rel (%p134) target = $region20
      $region19: #{tpu_custom_call.1} parent=5 // pred_region
        // Predicated region
        $region21: #{tpu_custom_call.1} parent=19 // pred_check
          %p137 = pneg %p36
        $region22: #{tpu_custom_call.1} parent=19 // pred_check_branch
          %139 = sbr.rel (%p137) target = $region24
        $region23: #{tpu_custom_call.1} parent=19 // pred_region
          %p140 = scmp.lt.s32.totalorder %s16, 1
          %s141 = scalar_select %p140, %s16, 1
          %s142 = smul.addr %s141, 72
          %s143 = smul.addr %s142, 4
          %s144 = scalar_lea.vmem %s0, %s143
        $region24: #{tpu_custom_call.1} parent=19 // pred_fallthru
          _
      $region20: #{tpu_custom_call.1} parent=5 // pred_fallthru
        _
      %p145 = scmp.le.s32.totalorder 1, %s16
      %p146 = scmp.lt.s32.totalorder %s16, 3
      %p147 = pnand %p145, %p146
      %p148 = pneg %p147
      // Predicated region
      $region25: #{tpu_custom_call.1} parent=5 // pred_check
        _
      $region26: #{tpu_custom_call.1} parent=5 // pred_check_branch
        %150 = sbr.rel (%p147) target = $region28
      $region27: #{tpu_custom_call.1} parent=5 // pred_region
        %s151 = ssub.s32 %s16, 1
        %p152 = scmp.lt.s32.totalorder %s21, 1
        %s153 = scalar_select %p152, %s21, 1
        %s154 = smul.addr %s153, 72
        %s155 = smul.addr %s154, 4
        %s156 = scalar_lea.vmem %s0, %s155
        %p157 = pneg %p42
        %p158 = pneg %p39
        %p159 = pneg %p63
        %p160 = pneg %p60
        %p161 = pneg %p89
        %p162 = pneg %p86
        %s163 = sand.u32 %s76, 1
        %s164 = scalar_lea.sflag [#allocation3], %s163
        %s165 = sand.u32 %s76, 1
        %s166 = smul.addr %s165, 64
        %s167 = scalar_lea.vmem [#allocation2], %s166
        %p168 = pneg %p115
        %p169 = pneg %p112
        %s170 = sand.u32 %s102, 1
        %s171 = scalar_lea.sflag [#allocation5], %s170
        %s172 = sand.u32 %s102, 1
        %s173 = smul.addr %s172, 4
        %s174 = scalar_lea.vmem [#allocation4], %s173
        %p175 = scmp.lt.s32.totalorder %s21, 1
        %s176 = scalar_select %p175, %s21, 1
        %s177 = smul.addr %s176, 72
        %s178 = smul.addr %s177, 4
        %s179 = scalar_lea.vmem %s0, %s178
        %v181 = vld [vmem:[%s179] sm:$0xf]
        %v182 = vld [vmem:[%s179 + $0x4] sm:$0x1]
        %v183 = vld [vmem:[%s179 + $0x8] sm:$0xf]
        %v184 = vld [vmem:[%s179 + $0xc] sm:$0x1]
        %v185 = vld [vmem:[%s179 + $0x10] sm:$0xf]
        %v186 = vld [vmem:[%s179 + $0x14] sm:$0x1]
        %v187 = vld [vmem:[%s179 + $0x18] sm:$0xf]
        %v188 = vld [vmem:[%s179 + $0x1c] sm:$0x1]
        %v189 = vld [vmem:[%s179 + $0x20] sm:$0xf]
        %v190 = vld [vmem:[%s179 + $0x24] sm:$0x1]
        %v191 = vld [vmem:[%s179 + $0x28] sm:$0xf]
        %v192 = vld [vmem:[%s179 + $0x2c] sm:$0x1]
        %v193 = vld [vmem:[%s179 + $0x30] sm:$0xf]
        %v194 = vld [vmem:[%s179 + $0x34] sm:$0x1]
        %v195 = vld [vmem:[%s179 + $0x38] sm:$0xf]
        %v196 = vld [vmem:[%s179 + $0x3c] sm:$0x1]
        %v197 = vld [vmem:[%s179 + $0x40] sm:$0xf]
        %v198 = vld [vmem:[%s179 + $0x44] sm:$0x1]
        %v199 = vld [vmem:[%s179 + $0x48] sm:$0xf]
        %v200 = vld [vmem:[%s179 + $0x50] sm:$0xf]
        %v201 = vld [vmem:[%s179 + $0x58] sm:$0xf]
        %v202 = vld [vmem:[%s179 + $0x60] sm:$0xf]
        %v203 = vld [vmem:[%s179 + $0x68] sm:$0xf]
        %v204 = vld [vmem:[%s179 + $0x70] sm:$0xf]
        %v205 = vld [vmem:[%s179 + $0x78] sm:$0xf]
        %v206 = vld [vmem:[%s179 + $0x80] sm:$0xf]
        %v207 = vld [vmem:[%s179 + $0x88] sm:$0xf]
        %v208 = vld [vmem:[%s179 + $0x90] sm:$0xf]
        %v209 = vld [vmem:[%s179 + $0x94] sm:$0x1]
        %v210 = vld [vmem:[%s179 + $0x98] sm:$0xf]
        %v211 = vld [vmem:[%s179 + $0x9c] sm:$0x1]
        %v212 = vld [vmem:[%s179 + $0xa0] sm:$0xf]
        %v213 = vld [vmem:[%s179 + $0xa4] sm:$0x1]
        %v214 = vld [vmem:[%s179 + $0xa8] sm:$0xf]
        %v215 = vld [vmem:[%s179 + $0xac] sm:$0x1]
        %v216 = vld [vmem:[%s179 + $0xb0] sm:$0xf]
        %v217 = vld [vmem:[%s179 + $0xb4] sm:$0x1]
        %v218 = vld [vmem:[%s179 + $0xb8] sm:$0xf]
        %v219 = vld [vmem:[%s179 + $0xbc] sm:$0x1]
        %v220 = vld [vmem:[%s179 + $0xc0] sm:$0xf]
        %v221 = vld [vmem:[%s179 + $0xc4] sm:$0x1]
        %v222 = vld [vmem:[%s179 + $0xc8] sm:$0xf]
        %v223 = vld [vmem:[%s179 + $0xcc] sm:$0x1]
        %v224 = vld [vmem:[%s179 + $0xd8] sm:$0xf]
        %v225 = vld [vmem:[%s179 + $0xe0] sm:$0xf]
        %v226 = vld [vmem:[%s179 + $0xe8] sm:$0xf]
        %v227 = vld [vmem:[%s179 + $0xf0] sm:$0xf]
        %v228 = vld [vmem:[%s179 + $0xf8] sm:$0xf]
        %v229 = vld [vmem:[%s179 + $0x100] sm:$0xf]
        %v230 = vld [vmem:[%s179 + $0x108] sm:$0xf]
        %v231 = vld [vmem:[%s179 + $0x110] sm:$0xf]
        %v240 = vunpack.c.l.b16 %v199
        %v241 = vunpack.c.l.b16 %v200
        %v242 = vunpack.c.l.b16 %v201
        %v243 = vunpack.c.l.b16 %v202
        %v244 = vunpack.c.l.b16 %v203
        %v245 = vunpack.c.l.b16 %v204
        %v246 = vunpack.c.l.b16 %v205
        %v247 = vunpack.c.l.b16 %v206
        %v248 = vpack.c.b16 %v240, %v240
        %v249 = vpack.c.b16 %v241, %v241
        %v250 = vpack.c.b16 %v242, %v242
        %v251 = vpack.c.b16 %v243, %v243
        %v252 = vpack.c.b16 %v244, %v244
        %v253 = vpack.c.b16 %v245, %v245
        %v254 = vpack.c.b16 %v246, %v246
        %v255 = vpack.c.b16 %v247, %v247
        %256 = vrot.lane.b32.xlu0 %v248, 4
        %v257 = vpop.permute.xlu0 %256
        %258 = vrot.lane.b32.xlu0 %v249, 4
        %v259 = vpop.permute.xlu0 %258
        %260 = vrot.lane.b32.xlu0 %v250, 4
        %v261 = vpop.permute.xlu0 %260
        %262 = vrot.lane.b32.xlu0 %v251, 4
        %v263 = vpop.permute.xlu0 %262
        %264 = vrot.lane.b32.xlu0 %v252, 4
        %v265 = vpop.permute.xlu0 %264
        %266 = vrot.lane.b32.xlu0 %v253, 4
        %v267 = vpop.permute.xlu0 %266
        %268 = vrot.lane.b32.xlu0 %v254, 4
        %v269 = vpop.permute.xlu0 %268
        %270 = vrot.lane.b32.xlu0 %v255, 4
        %v271 = vpop.permute.xlu0 %270
        %v288 = vunpack.c.l.b16 %v181
        %v289 = vunpack.c.l.b16 %v182
        %v290 = vunpack.c.l.b16 %v183
        %v291 = vunpack.c.l.b16 %v184
        %v292 = vunpack.c.l.b16 %v185
        %v293 = vunpack.c.l.b16 %v186
        %v294 = vunpack.c.l.b16 %v187
        %v295 = vunpack.c.l.b16 %v188
        %v296 = vunpack.c.l.b16 %v189
        %v297 = vunpack.c.l.b16 %v190
        %v298 = vunpack.c.l.b16 %v191
        %v299 = vunpack.c.l.b16 %v192
        %v300 = vunpack.c.l.b16 %v193
        %v301 = vunpack.c.l.b16 %v194
        %v302 = vunpack.c.l.b16 %v195
        %v303 = vunpack.c.l.b16 %v196
        %v304 = vpack.c.b16 %v289, %v288
        %v305 = vpack.c.b16 %v291, %v290
        %v306 = vpack.c.b16 %v293, %v292
        %v307 = vpack.c.b16 %v295, %v294
        %v308 = vpack.c.b16 %v297, %v296
        %v309 = vpack.c.b16 %v299, %v298
        %v310 = vpack.c.b16 %v301, %v300
        %v311 = vpack.c.b16 %v303, %v302
        %v313 = vshrl.u32 %v304, 16
        %v315 = vshll.u32 %v304, 16
        %v317 = vrot.slane %v315, 1
        %v318 = vor.u32 %v313, %v317
        %v320 = vshrl.u32 %v305, 16
        %v322 = vshll.u32 %v305, 16
        %v324 = vrot.slane %v322, 1
        %v325 = vor.u32 %v320, %v324
        %v327 = vshrl.u32 %v306, 16
        %v329 = vshll.u32 %v306, 16
        %v331 = vrot.slane %v329, 1
        %v332 = vor.u32 %v327, %v331
        %v334 = vshrl.u32 %v307, 16
        %v336 = vshll.u32 %v307, 16
        %v338 = vrot.slane %v336, 1
        %v339 = vor.u32 %v334, %v338
        %v341 = vshrl.u32 %v308, 16
        %v343 = vshll.u32 %v308, 16
        %v345 = vrot.slane %v343, 1
        %v346 = vor.u32 %v341, %v345
        %v348 = vshrl.u32 %v309, 16
        %v350 = vshll.u32 %v309, 16
        %v352 = vrot.slane %v350, 1
        %v353 = vor.u32 %v348, %v352
        %v355 = vshrl.u32 %v310, 16
        %v357 = vshll.u32 %v310, 16
        %v359 = vrot.slane %v357, 1
        %v360 = vor.u32 %v355, %v359
        %v362 = vshrl.u32 %v311, 16
        %v364 = vshll.u32 %v311, 16
        %v366 = vrot.slane %v364, 1
        %v367 = vor.u32 %v362, %v366
        %368 = vrot.lane.b32.xlu0 %v318, 8
        %v369 = vpop.permute.xlu0 %368
        %370 = vrot.lane.b32.xlu0 %v325, 8
        %v371 = vpop.permute.xlu0 %370
        %372 = vrot.lane.b32.xlu0 %v332, 8
        %v373 = vpop.permute.xlu0 %372
        %374 = vrot.lane.b32.xlu0 %v339, 8
        %v375 = vpop.permute.xlu0 %374
        %376 = vrot.lane.b32.xlu0 %v346, 8
        %v377 = vpop.permute.xlu0 %376
        %378 = vrot.lane.b32.xlu0 %v353, 8
        %v379 = vpop.permute.xlu0 %378
        %380 = vrot.lane.b32.xlu0 %v360, 8
        %v381 = vpop.permute.xlu0 %380
        %382 = vrot.lane.b32.xlu0 %v367, 8
        %v383 = vpop.permute.xlu0 %382
        %v392 = vunpack.c.l.b16 %v208
        %v393 = vunpack.c.l.b16 %v210
        %v394 = vunpack.c.l.b16 %v212
        %v395 = vunpack.c.l.b16 %v214
        %v396 = vunpack.c.l.b16 %v216
        %v397 = vunpack.c.l.b16 %v218
        %v398 = vunpack.c.l.b16 %v220
        %v399 = vunpack.c.l.b16 %v222
        %v400 = vpack.c.b16 %v392, %v392
        %v401 = vpack.c.b16 %v393, %v393
        %v402 = vpack.c.b16 %v394, %v394
        %v403 = vpack.c.b16 %v395, %v395
        %v404 = vpack.c.b16 %v396, %v396
        %v405 = vpack.c.b16 %v397, %v397
        %v406 = vpack.c.b16 %v398, %v398
        %v407 = vpack.c.b16 %v399, %v399
        %408 = vrot.lane.b32.xlu0 %v400, 12
        %v409 = vpop.permute.xlu0 %408
        %410 = vrot.lane.b32.xlu0 %v401, 12
        %v411 = vpop.permute.xlu0 %410
        %412 = vrot.lane.b32.xlu0 %v402, 12
        %v413 = vpop.permute.xlu0 %412
        %414 = vrot.lane.b32.xlu0 %v403, 12
        %v415 = vpop.permute.xlu0 %414
        %416 = vrot.lane.b32.xlu0 %v404, 12
        %v417 = vpop.permute.xlu0 %416
        %418 = vrot.lane.b32.xlu0 %v405, 12
        %v419 = vpop.permute.xlu0 %418
        %420 = vrot.lane.b32.xlu0 %v406, 12
        %v421 = vpop.permute.xlu0 %420
        %422 = vrot.lane.b32.xlu0 %v407, 12
        %v423 = vpop.permute.xlu0 %422
        %v432 = vunpack.c.l.b16 %v224
        %v433 = vunpack.c.l.b16 %v225
        %v434 = vunpack.c.l.b16 %v226
        %v435 = vunpack.c.l.b16 %v227
        %v436 = vunpack.c.l.b16 %v228
        %v437 = vunpack.c.l.b16 %v229
        %v438 = vunpack.c.l.b16 %v230
        %v439 = vunpack.c.l.b16 %v231
        %v440 = vpack.c.b16 %v432, %v432
        %v441 = vpack.c.b16 %v433, %v433
        %v442 = vpack.c.b16 %v434, %v434
        %v443 = vpack.c.b16 %v435, %v435
        %v444 = vpack.c.b16 %v436, %v436
        %v445 = vpack.c.b16 %v437, %v437
        %v446 = vpack.c.b16 %v438, %v438
        %v447 = vpack.c.b16 %v439, %v439
        %448 = vrot.lane.b32.xlu0 %v440, 16
        %v449 = vpop.permute.xlu0 %448
        %450 = vrot.lane.b32.xlu0 %v441, 16
        %v451 = vpop.permute.xlu0 %450
        %452 = vrot.lane.b32.xlu0 %v442, 16
        %v453 = vpop.permute.xlu0 %452
        %454 = vrot.lane.b32.xlu0 %v443, 16
        %v455 = vpop.permute.xlu0 %454
        %456 = vrot.lane.b32.xlu0 %v444, 16
        %v457 = vpop.permute.xlu0 %456
        %458 = vrot.lane.b32.xlu0 %v445, 16
        %v459 = vpop.permute.xlu0 %458
        %460 = vrot.lane.b32.xlu0 %v446, 16
        %v461 = vpop.permute.xlu0 %460
        %462 = vrot.lane.b32.xlu0 %v447, 16
        %v463 = vpop.permute.xlu0 %462
        %v472 = vunpack.c.l.b16 %v209
        %v473 = vunpack.c.l.b16 %v211
        %v474 = vunpack.c.l.b16 %v213
        %v475 = vunpack.c.l.b16 %v215
        %v476 = vunpack.c.l.b16 %v217
        %v477 = vunpack.c.l.b16 %v219
        %v478 = vunpack.c.l.b16 %v221
        %v479 = vunpack.c.l.b16 %v223
        %v480 = vpack.c.b16 %v472, %v392
        %v481 = vpack.c.b16 %v473, %v393
        %v482 = vpack.c.b16 %v474, %v394
        %v483 = vpack.c.b16 %v475, %v395
        %v484 = vpack.c.b16 %v476, %v396
        %v485 = vpack.c.b16 %v477, %v397
        %v486 = vpack.c.b16 %v478, %v398
        %v487 = vpack.c.b16 %v479, %v399
        %v489 = vshrl.u32 %v480, 16
        %v491 = vshll.u32 %v480, 16
        %v493 = vrot.slane %v491, 1
        %v494 = vor.u32 %v489, %v493
        %v496 = vshrl.u32 %v481, 16
        %v498 = vshll.u32 %v481, 16
        %v500 = vrot.slane %v498, 1
        %v501 = vor.u32 %v496, %v500
        %v503 = vshrl.u32 %v482, 16
        %v505 = vshll.u32 %v482, 16
        %v507 = vrot.slane %v505, 1
        %v508 = vor.u32 %v503, %v507
        %v510 = vshrl.u32 %v483, 16
        %v512 = vshll.u32 %v483, 16
        %v514 = vrot.slane %v512, 1
        %v515 = vor.u32 %v510, %v514
        %v517 = vshrl.u32 %v484, 16
        %v519 = vshll.u32 %v484, 16
        %v521 = vrot.slane %v519, 1
        %v522 = vor.u32 %v517, %v521
        %v524 = vshrl.u32 %v485, 16
        %v526 = vshll.u32 %v485, 16
        %v528 = vrot.slane %v526, 1
        %v529 = vor.u32 %v524, %v528
        %v531 = vshrl.u32 %v486, 16
        %v533 = vshll.u32 %v486, 16
        %v535 = vrot.slane %v533, 1
        %v536 = vor.u32 %v531, %v535
        %v538 = vshrl.u32 %v487, 16
        %v540 = vshll.u32 %v487, 16
        %v542 = vrot.slane %v540, 1
        %v543 = vor.u32 %v538, %v542
        %544 = vrot.lane.b32.xlu0 %v494, 20
        %v545 = vpop.permute.xlu0 %544
        %546 = vrot.lane.b32.xlu0 %v501, 20
        %v547 = vpop.permute.xlu0 %546
        %548 = vrot.lane.b32.xlu0 %v508, 20
        %v549 = vpop.permute.xlu0 %548
        %550 = vrot.lane.b32.xlu0 %v515, 20
        %v551 = vpop.permute.xlu0 %550
        %552 = vrot.lane.b32.xlu0 %v522, 20
        %v553 = vpop.permute.xlu0 %552
        %554 = vrot.lane.b32.xlu0 %v529, 20
        %v555 = vpop.permute.xlu0 %554
        %556 = vrot.lane.b32.xlu0 %v536, 20
        %v557 = vpop.permute.xlu0 %556
        %558 = vrot.lane.b32.xlu0 %v543, 20
        %v559 = vpop.permute.xlu0 %558
        %v561 = vunpack.c.l.b16 %v197
        %v562 = vpack.c.b16 %v290, %v290
        %v563 = vpack.c.b16 %v292, %v292
        %v564 = vpack.c.b16 %v294, %v294
        %v565 = vpack.c.b16 %v296, %v296
        %v566 = vpack.c.b16 %v298, %v298
        %v567 = vpack.c.b16 %v300, %v300
        %v568 = vpack.c.b16 %v302, %v302
        %v569 = vpack.c.b16 %v561, %v561
        %570 = vrot.lane.b32.xlu0 %v562, 24
        %v571 = vpop.permute.xlu0 %570
        %572 = vrot.lane.b32.xlu0 %v563, 24
        %v573 = vpop.permute.xlu0 %572
        %574 = vrot.lane.b32.xlu0 %v564, 24
        %v575 = vpop.permute.xlu0 %574
        %576 = vrot.lane.b32.xlu0 %v565, 24
        %v577 = vpop.permute.xlu0 %576
        %578 = vrot.lane.b32.xlu0 %v566, 24
        %v579 = vpop.permute.xlu0 %578
        %580 = vrot.lane.b32.xlu0 %v567, 24
        %v581 = vpop.permute.xlu0 %580
        %582 = vrot.lane.b32.xlu0 %v568, 24
        %v583 = vpop.permute.xlu0 %582
        %584 = vrot.lane.b32.xlu0 %v569, 24
        %v585 = vpop.permute.xlu0 %584
        %v587 = vunpack.c.l.b16 %v207
        %v588 = vpack.c.b16 %v587, %v587
        %589 = vrot.lane.b32.xlu0 %v249, 28
        %v590 = vpop.permute.xlu0 %589
        %591 = vrot.lane.b32.xlu0 %v250, 28
        %v592 = vpop.permute.xlu0 %591
        %593 = vrot.lane.b32.xlu0 %v251, 28
        %v594 = vpop.permute.xlu0 %593
        %595 = vrot.lane.b32.xlu0 %v252, 28
        %v596 = vpop.permute.xlu0 %595
        %597 = vrot.lane.b32.xlu0 %v253, 28
        %v598 = vpop.permute.xlu0 %597
        %599 = vrot.lane.b32.xlu0 %v254, 28
        %v600 = vpop.permute.xlu0 %599
        %601 = vrot.lane.b32.xlu0 %v255, 28
        %v602 = vpop.permute.xlu0 %601
        %603 = vrot.lane.b32.xlu0 %v588, 28
        %v604 = vpop.permute.xlu0 %603
        %v606 = vunpack.c.l.b16 %v198
        %v607 = vpack.c.b16 %v606, %v561
        %v609 = vshrl.u32 %v607, 16
        %v611 = vshll.u32 %v607, 16
        %v613 = vrot.slane %v611, 1
        %v614 = vor.u32 %v609, %v613
        %615 = vrot.lane.b32.xlu0 %v325, 32
        %v616 = vpop.permute.xlu0 %615
        %617 = vrot.lane.b32.xlu0 %v332, 32
        %v618 = vpop.permute.xlu0 %617
        %619 = vrot.lane.b32.xlu0 %v339, 32
        %v620 = vpop.permute.xlu0 %619
        %621 = vrot.lane.b32.xlu0 %v346, 32
        %v622 = vpop.permute.xlu0 %621
        %623 = vrot.lane.b32.xlu0 %v353, 32
        %v624 = vpop.permute.xlu0 %623
        %625 = vrot.lane.b32.xlu0 %v360, 32
        %v626 = vpop.permute.xlu0 %625
        %627 = vrot.lane.b32.xlu0 %v367, 32
        %v628 = vpop.permute.xlu0 %627
        %629 = vrot.lane.b32.xlu0 %v614, 32
        %v630 = vpop.permute.xlu0 %629
        %vm631 = vcmask 31744
        %v634 = vsel %vm631, %v181, %v257
        %v637 = vsel %vm631, %v183, %v259
        %v640 = vsel %vm631, %v185, %v261
        %v643 = vsel %vm631, %v187, %v263
        %v646 = vsel %vm631, %v189, %v265
        %v649 = vsel %vm631, %v191, %v267
        %v652 = vsel %vm631, %v193, %v269
        %v655 = vsel %vm631, %v195, %v271
        %vm656 = vcmask 64512
        %v658 = vsel %vm656, %v634, %v369
        %v660 = vsel %vm656, %v637, %v371
        %v662 = vsel %vm656, %v640, %v373
        %v664 = vsel %vm656, %v643, %v375
        %v666 = vsel %vm656, %v646, %v377
        %v668 = vsel %vm656, %v649, %v379
        %v670 = vsel %vm656, %v652, %v381
        %v672 = vsel %vm656, %v655, %v383
        %vm673 = vcmask 97280
        %v675 = vsel %vm673, %v658, %v409
        %v677 = vsel %vm673, %v660, %v411
        %v679 = vsel %vm673, %v662, %v413
        %v681 = vsel %vm673, %v664, %v415
        %v683 = vsel %vm673, %v666, %v417
        %v685 = vsel %vm673, %v668, %v419
        %v687 = vsel %vm673, %v670, %v421
        %v689 = vsel %vm673, %v672, %v423
        %vm690 = vcmask 130048
        %v692 = vsel %vm690, %v675, %v449
        %v694 = vsel %vm690, %v677, %v451
        %v696 = vsel %vm690, %v679, %v453
        %v698 = vsel %vm690, %v681, %v455
        %v700 = vsel %vm690, %v683, %v457
        %v702 = vsel %vm690, %v685, %v459
        %v704 = vsel %vm690, %v687, %v461
        %v706 = vsel %vm690, %v689, %v463
        %vm707 = vcmask 162816
        %v709 = vsel %vm707, %v692, %v545
        %v711 = vsel %vm707, %v694, %v547
        %v713 = vsel %vm707, %v696, %v549
        %v715 = vsel %vm707, %v698, %v551
        %v717 = vsel %vm707, %v700, %v553
        %v719 = vsel %vm707, %v702, %v555
        %v721 = vsel %vm707, %v704, %v557
        %v723 = vsel %vm707, %v706, %v559
        %vm724 = vcmask 195584
        %v726 = vsel %vm724, %v709, %v571
        %v728 = vsel %vm724, %v711, %v573
        %v730 = vsel %vm724, %v713, %v575
        %v732 = vsel %vm724, %v715, %v577
        %v734 = vsel %vm724, %v717, %v579
        %v736 = vsel %vm724, %v719, %v581
        %v738 = vsel %vm724, %v721, %v583
        %v740 = vsel %vm724, %v723, %v585
        %vm741 = vcmask 228352
        %v743 = vsel %vm741, %v726, %v590
        %v745 = vsel %vm741, %v728, %v592
        %v747 = vsel %vm741, %v730, %v594
        %v749 = vsel %vm741, %v732, %v596
        %v751 = vsel %vm741, %v734, %v598
        %v753 = vsel %vm741, %v736, %v600
        %v755 = vsel %vm741, %v738, %v602
        %v757 = vsel %vm741, %v740, %v604
        %vm758 = vcmask 261120
        %v760 = vsel %vm758, %v743, %v616
        %v762 = vsel %vm758, %v745, %v618
        %v764 = vsel %vm758, %v747, %v620
        %v766 = vsel %vm758, %v749, %v622
        %v768 = vsel %vm758, %v751, %v624
        %v770 = vsel %vm758, %v753, %v626
        %v772 = vsel %vm758, %v755, %v628
        %v774 = vsel %vm758, %v757, %v630
        %v775 = vld [vmem:[%s1] sm:$0xf]
        %v776 = vld [vmem:[%s1 + $0x4] sm:$0xf]
        %v777 = vld [vmem:[%s1 + $0x8] sm:$0xf]
        %v778 = vld [vmem:[%s1 + $0xc] sm:$0xf]
        %v779 = vld [vmem:[%s1 + $0x10] sm:$0x3]
        %v788 = vunpack.c.l.b16 %v760
        %v789 = vunpack.c.l.b16 %v762
        %v790 = vunpack.c.l.b16 %v764
        %v791 = vunpack.c.l.b16 %v766
        %v792 = vunpack.c.l.b16 %v768
        %v793 = vunpack.c.l.b16 %v770
        %v794 = vunpack.c.l.b16 %v772
        %v795 = vunpack.c.l.b16 %v774
        %v796 = vpack.c.b16 %v789, %v788
        %v797 = vpack.c.b16 %v791, %v790
        %v798 = vpack.c.b16 %v793, %v792
        %v799 = vpack.c.b16 %v795, %v794
        %v805 = vunpack.c.l.b16 %v775
        %v806 = vunpack.c.l.b16 %v776
        %v807 = vunpack.c.l.b16 %v777
        %v808 = vunpack.c.l.b16 %v778
        %v809 = vunpack.c.l.b16 %v779
        %v810 = vpack.c.b16 %v806, %v805
        %v811 = vpack.c.b16 %v808, %v807
        %v812 = vpack.c.b16 %v809, %v809
        %vm815 = vcmask 293888
        %v817 = vsel %vm815, %v796, 0
        %v820 = vsel %vm815, %v797, 0
        %v823 = vsel %vm815, %v798, 0
        %v826 = vsel %vm815, %v799, 0
        %vm828 = vcmask 1041408
        %v830 = vsel %vm828, %v812, 0
        %832 = vmatprep.subr.bf16.mxu0 0
        %833 = vmatpush1.bf16.msra.mxu0 %v810
        %834 = vmatprep.subr.bf16.mxu0 0
        %835 = vmatpush1.bf16.msra.mxu0 %v811
        %836 = vmatprep.subr.bf16.mxu0 0
        %837 = vmatpush1.bf16.msra.mxu0 %v830
        %838 = vmatprep.subr.bf16.mxu0 0
        %839 = vmatpush1.bf16.msra.mxu0 0
        %840 = vmatprep.subr.bf16.mxu0 0
        %841 = vmatpush1.bf16.msra.mxu0 0
        %842 = vmatprep.subr.bf16.mxu0 0
        %843 = vmatpush1.bf16.msra.mxu0 0
        %844 = vmatprep.subr.bf16.mxu0 0
        %845 = vmatpush1.bf16.msra.mxu0 0
        %846 = vmatprep.subr.bf16.mxu0 0
        %847 = vmatpush1.bf16.msra.mxu0 0
        %848 = vmatprep.subr.bf16.mxu0 0
        %849 = vmatpush1.bf16.msra.mxu0 0
        %850 = vmatprep.subr.bf16.mxu0 0
        %851 = vmatpush1.bf16.msra.mxu0 0
        %852 = vmatprep.subr.bf16.mxu0 0
        %853 = vmatpush1.bf16.msra.mxu0 0
        %854 = vmatprep.subr.bf16.mxu0 0
        %855 = vmatpush1.bf16.msra.mxu0 0
        %856 = vmatprep.subr.bf16.mxu0 0
        %857 = vmatpush1.bf16.msra.mxu0 0
        %858 = vmatprep.subr.bf16.mxu0 0
        %859 = vmatpush1.bf16.msra.mxu0 0
        %860 = vmatprep.subr.bf16.mxu0 0
        %861 = vmatpush1.bf16.msra.mxu0 0
        %862 = vmatprep.subr.bf16.mxu0 0
        %863 = vmatpush1.bf16.msra.mxu0 0
        %864 = vmatprep.mubr.bf16.mxu0 0
        %865 = vmatmul.mubr.bf16.gmra.mrb[0].mxu0 %v817
        %v866 = vpop.f32.mrb[0].mxu0
        %v867 = vadd.f32 0.0, %v866
        %v868 = vpop.f32.mrb[0].mxu0
        %v869 = vpop.f32.mrb[0].mxu0
        %v870 = vadd.f32 0.0, %v869
        %v871 = vpop.f32.mrb[0].mxu0
        %872 = vmatprep.mubr.bf16.mxu0 0
        %873 = vmatmul.mubr.bf16.gmra.mrb[0].mxu0 %v820
        %v874 = vpop.f32.mrb[0].mxu0
        %v875 = vadd.f32 0.0, %v874
        %v876 = vpop.f32.mrb[0].mxu0
        %v877 = vpop.f32.mrb[0].mxu0
        %v878 = vadd.f32 0.0, %v877
        %v879 = vpop.f32.mrb[0].mxu0
        %880 = vmatprep.mubr.bf16.mxu0 0
        %881 = vmatmul.mubr.bf16.gmra.mrb[0].mxu0 %v823
        %v882 = vpop.f32.mrb[0].mxu0
        %v883 = vadd.f32 0.0, %v882
        %v884 = vpop.f32.mrb[0].mxu0
        %v885 = vpop.f32.mrb[0].mxu0
        %v886 = vadd.f32 0.0, %v885
        %v887 = vpop.f32.mrb[0].mxu0
        %888 = vmatprep.mubr.bf16.mxu0 0
        %889 = vmatmul.mubr.bf16.gmra.mrb[0].mxu0 %v826
        %v890 = vpop.f32.mrb[0].mxu0
        %v891 = vadd.f32 0.0, %v890
        %v892 = vpop.f32.mrb[0].mxu0
        %v893 = vpop.f32.mrb[0].mxu0
        %v894 = vadd.f32 0.0, %v893
        %v895 = vpop.f32.mrb[0].mxu0
        %896 = vdwg.mxu0
        %897 = vst.msk [vmem:[%s167] sm:$0xff] %vm656, %v867
        %898 = vst.msk [vmem:[%s167 + $0x8] sm:$0xff] %vm656, %v870
        %899 = vst.msk [vmem:[%s167 + $0x10] sm:$0xff] %vm656, %v875
        %900 = vst.msk [vmem:[%s167 + $0x18] sm:$0xff] %vm656, %v878
        %901 = vst.msk [vmem:[%s167 + $0x20] sm:$0xff] %vm656, %v883
        %902 = vst.msk [vmem:[%s167 + $0x28] sm:$0xff] %vm656, %v886
        %903 = vst.msk [vmem:[%s167 + $0x30] sm:$0xff] %vm656, %v891
        %904 = vst.msk [vmem:[%s167 + $0x38] sm:$0xff] %vm656, %v894
        %v905 = vsel %vm656, %v867, 0.0
        %v906 = vsel %vm656, %v870, 0.0
        %v907 = vadd.f32 %v905, %v906
        %v908 = vsel %vm656, %v875, 0.0
        %v909 = vadd.f32 %v907, %v908
        %v910 = vsel %vm656, %v878, 0.0
        %v911 = vadd.f32 %v909, %v910
        %v912 = vsel %vm656, %v883, 0.0
        %v913 = vadd.f32 %v911, %v912
        %v914 = vsel %vm656, %v886, 0.0
        %v915 = vadd.f32 %v913, %v914
        %v916 = vsel %vm656, %v891, 0.0
        %v917 = vadd.f32 %v915, %v916
        %v918 = vsel %vm656, %v894, 0.0
        %v919 = vadd.f32 %v917, %v918
        %v920 = vrot.slane %v919, 4
        %v921 = vadd.f32 %v919, %v920
        %v922 = vrot.slane %v921, 2
        %v923 = vadd.f32 %v921, %v922
        %v924 = vrot.slane %v923, 1
        %v925 = vadd.f32 %v923, %v924
        %v926 = vrcp.pop 64.0
        %v927 = vmul.f32 %v925, %v926
        %v928 = vsub.f32 %v867, %v927
        %v929 = vsub.f32 %v870, %v927
        %v930 = vsub.f32 %v875, %v927
        %v931 = vsub.f32 %v878, %v927
        %v932 = vsub.f32 %v883, %v927
        %v933 = vsub.f32 %v886, %v927
        %v934 = vsub.f32 %v891, %v927
        %v935 = vsub.f32 %v894, %v927
        %v936 = vmul.f32 %v928, %v928
        %v937 = vmul.f32 %v929, %v929
        %v938 = vmul.f32 %v930, %v930
        %v939 = vmul.f32 %v931, %v931
        %v940 = vmul.f32 %v932, %v932
        %v941 = vmul.f32 %v933, %v933
        %v942 = vmul.f32 %v934, %v934
        %v943 = vmul.f32 %v935, %v935
        %v944 = vsel %vm656, %v936, 0.0
        %v945 = vsel %vm656, %v937, 0.0
        %v946 = vadd.f32 %v944, %v945
        %v947 = vsel %vm656, %v938, 0.0
        %v948 = vadd.f32 %v946, %v947
        %v949 = vsel %vm656, %v939, 0.0
        %v950 = vadd.f32 %v948, %v949
        %v951 = vsel %vm656, %v940, 0.0
        %v952 = vadd.f32 %v950, %v951
        %v953 = vsel %vm656, %v941, 0.0
        %v954 = vadd.f32 %v952, %v953
        %v955 = vsel %vm656, %v942, 0.0
        %v956 = vadd.f32 %v954, %v955
        %v957 = vsel %vm656, %v943, 0.0
        %v958 = vadd.f32 %v956, %v957
        %v959 = vrot.slane %v958, 4
        %v960 = vadd.f32 %v958, %v959
        %v961 = vrot.slane %v960, 2
        %v962 = vadd.f32 %v960, %v961
        %v963 = vrot.slane %v962, 1
        %v964 = vadd.f32 %v962, %v963
        %vm965 = vcmask 130112
        %v966 = vsel %vm965, %v867, 0.0
        %v967 = vsel %vm965, %v870, 0.0
        %v968 = vadd.f32 %v966, %v967
        %v969 = vsel %vm965, %v875, 0.0
        %v970 = vadd.f32 %v968, %v969
        %v971 = vsel %vm965, %v878, 0.0
        %v972 = vadd.f32 %v970, %v971
        %v973 = vsel %vm965, %v883, 0.0
        %v974 = vadd.f32 %v972, %v973
        %v975 = vsel %vm965, %v886, 0.0
        %v976 = vadd.f32 %v974, %v975
        %v977 = vsel %vm965, %v891, 0.0
        %v978 = vadd.f32 %v976, %v977
        %v979 = vsel %vm965, %v894, 0.0
        %v980 = vadd.f32 %v978, %v979
        %v981 = vrot.slane %v980, 4
        %v982 = vadd.f32 %v980, %v981
        %v983 = vrot.slane %v982, 2
        %v984 = vadd.f32 %v982, %v983
        %v985 = vrot.slane %v984, 1
        %v986 = vadd.f32 %v984, %v985
        %v987 = vmul.f32 %v986, %v926
        %v988 = vsub.f32 %v867, %v987
        %v989 = vsub.f32 %v870, %v987
        %v990 = vsub.f32 %v875, %v987
        %v991 = vsub.f32 %v878, %v987
        %v992 = vsub.f32 %v883, %v987
        %v993 = vsub.f32 %v886, %v987
        %v994 = vsub.f32 %v891, %v987
        %v995 = vsub.f32 %v894, %v987
        %v996 = vmul.f32 %v988, %v988
        %v997 = vmul.f32 %v989, %v989
        %v998 = vmul.f32 %v990, %v990
        %v999 = vmul.f32 %v991, %v991
        %v1000 = vmul.f32 %v992, %v992
        %v1001 = vmul.f32 %v993, %v993
        %v1002 = vmul.f32 %v994, %v994
        %v1003 = vmul.f32 %v995, %v995
        %v1004 = vsel %vm965, %v996, 0.0
        %v1005 = vsel %vm965, %v997, 0.0
        %v1006 = vadd.f32 %v1004, %v1005
        %v1007 = vsel %vm965, %v998, 0.0
        %v1008 = vadd.f32 %v1006, %v1007
        %v1009 = vsel %vm965, %v999, 0.0
        %v1010 = vadd.f32 %v1008, %v1009
        %v1011 = vsel %vm965, %v1000, 0.0
        %v1012 = vadd.f32 %v1010, %v1011
        %v1013 = vsel %vm965, %v1001, 0.0
        %v1014 = vadd.f32 %v1012, %v1013
        %v1015 = vsel %vm965, %v1002, 0.0
        %v1016 = vadd.f32 %v1014, %v1015
        %v1017 = vsel %vm965, %v1003, 0.0
        %v1018 = vadd.f32 %v1016, %v1017
        %v1019 = vrot.slane %v1018, 4
        %v1020 = vadd.f32 %v1018, %v1019
        %v1021 = vrot.slane %v1020, 2
        %v1022 = vadd.f32 %v1020, %v1021
        %v1023 = vrot.slane %v1022, 1
        %v1024 = vadd.f32 %v1022, %v1023
        %1026 = vrot.lane.b32.xlu0 %v987, 120
        %v1027 = vpop.permute.xlu0 %1026
        %1030 = vrot.lane.b32.xlu0 %v1024, 120
        %v1031 = vpop.permute.xlu0 %1030
        %vm1033 = vcmask 1040384
        %v1034 = vsel %vm1033, %v927, %v964
        %v1035 = vsel %vm828, %v1034, %v1027
        %vm1036 = vcmask 1042432
        %v1037 = vsel %vm1036, %v1035, %v1031
        %vm1038 = vcmask 60416
        %1039 = vst.msk [vmem:[%s174] sm:$0xf] %vm1038, %v1037
        %s1040 = sand.u32 %s76, 1
        %s1041 = scalar_lea.sflag [#allocation3], %s1040
        %s1042 = sand.u32 %s76, 1
        %s1043 = smul.addr %s1042, 64
        %s1044 = scalar_lea.vmem [#allocation2], %s1043
        %s1045 = sand.u32 %s102, 1
        %s1046 = scalar_lea.sflag [#allocation5], %s1045
        %s1047 = sand.u32 %s102, 1
        %s1048 = smul.addr %s1047, 4
        %s1049 = scalar_lea.vmem [#allocation4], %s1048
        // Predicated region
        $region29: #{tpu_custom_call.1} parent=27 // pred_check
          %p1050 = pneg %p86
        $region30: #{tpu_custom_call.1} parent=27 // pred_check_branch
          %1052 = sbr.rel (%p1050) target = $region32
        $region31: #{tpu_custom_call.1} parent=27 // pred_region
          %s1054 = ssub.s32 1024, 1024
          %1055 = vsyncadd %s1041, %s1054
          %s1056 = smul.addr %s21, 8
          %s1057 = smul.addr %s1056, 128
          %s1058 = scalar_lea.hbm %s2, %s1057
          %s1059 = sshll.u32 %s1044, 4
          %s1060 = int_to_ptr.vmem [resolvable:$true] %s1059
          %1065 = dma.vmem_to_hbm [thread:$0]  %s1060, 1024, %s1058, %s1041, 128, 128, 8
        $region32: #{tpu_custom_call.1} parent=27 // pred_fallthru
          _
        // Predicated region
        $region33: #{tpu_custom_call.1} parent=27 // pred_check
          %p1066 = pneg %p112
        $region34: #{tpu_custom_call.1} parent=27 // pred_check_branch
          %1068 = sbr.rel (%p1066) target = $region36
        $region35: #{tpu_custom_call.1} parent=27 // pred_region
          %s1070 = ssub.s32 64, 64
          %1071 = vsyncadd %s1046, %s1070
          %s1072 = smul.addr %s21, 64
          %s1073 = scalar_lea.hbm %s3, %s1072
          %s1075 = sshll.u32 %s1049, 4
          %s1076 = int_to_ptr.vmem [resolvable:$true] %s1075
          %1078 = dma.vmem_to_hbm [thread:$0]  %s1076, 64, %s1073, %s1046
        $region36: #{tpu_custom_call.1} parent=27 // pred_fallthru
          _
      $region28: #{tpu_custom_call.1} parent=5 // pred_fallthru
        _
      %p1079 = scmp.le.s32.totalorder 2, %s16
      // Predicated region
      $region37: #{tpu_custom_call.1} parent=5 // pred_check
        %p1080 = pneg %p1079
      $region38: #{tpu_custom_call.1} parent=5 // pred_check_branch
        %1082 = sbr.rel (%p1080) target = $region40
      $region39: #{tpu_custom_call.1} parent=5 // pred_region
        %s1083 = ssub.s32 %s16, 2
        // Predicated region
        $region41: #{tpu_custom_call.1} parent=39 // pred_check
          %p1084 = pneg %p92
        $region42: #{tpu_custom_call.1} parent=39 // pred_check_branch
          %1086 = sbr.rel (%p1084) target = $region44
        $region43: #{tpu_custom_call.1} parent=39 // pred_region
          %s1087 = sand.u32 %s77, 1
          %s1088 = scalar_lea.sflag [#allocation3], %s1087
          %s1089 = sand.u32 %s77, 1
          %s1090 = smul.addr %s1089, 64
          %s1091 = scalar_lea.vmem [#allocation2], %s1090
          %1092 = dma.done %s1088, 1024
        $region44: #{tpu_custom_call.1} parent=39 // pred_fallthru
          _
        // Predicated region
        $region45: #{tpu_custom_call.1} parent=39 // pred_check
          %p1093 = pneg %p118
        $region46: #{tpu_custom_call.1} parent=39 // pred_check_branch
          %1095 = sbr.rel (%p1093) target = $region48
        $region47: #{tpu_custom_call.1} parent=39 // pred_region
          %s1096 = sand.u32 %s103, 1
          %s1097 = scalar_lea.sflag [#allocation5], %s1096
          %s1098 = sand.u32 %s103, 1
          %s1099 = smul.addr %s1098, 4
          %s1100 = scalar_lea.vmem [#allocation4], %s1099
          %1101 = dma.done %s1097, 64
        $region48: #{tpu_custom_call.1} parent=39 // pred_fallthru
          _
      $region40: #{tpu_custom_call.1} parent=5 // pred_fallthru
        _
    $region6: #{tpu_custom_call.1} parent=1 // loop_footer
      %s20 = sadd.s32 1, %s16
    $region7: #{tpu_custom_call.1} parent=1 // loop_footer_branch
      %15 = sbr.rel target = $region3
    $region8: #{tpu_custom_call.1} parent=1 // loop_exit
      _
    %1102 = vsyncpa [#allocation3], 1
    %s1103 = scalar_lea.sflag [#allocation3], 1
    %1104 = vsyncpa %s1103, 1
    %1105 = vsyncpa [#allocation5], 1
    %s1106 = scalar_lea.sflag [#allocation5], 1
    %1107 = vsyncpa %s1106, 1

</llo_original>
